<compile_context>
chip_gen: v7x
topology: tpu7x:2x2x1
jax: 0.10.0
libtpu: 0.0.40
codegen_flags: <defaults>
</compile_context>

<pallas_src>
import functools
import math

import jax
import jax.numpy as jnp
from jax.experimental import pallas as pl
from jax.experimental.pallas import tpu as pltpu


def _conv_bias_kernel(x_ref, w_ref, b_ref, o_ref, *, K, tile_rows, Wp):
    """One row-tile of the KxK 'same' conv as K row-shifted MXU matmuls.

    x_ref: ((tile_rows+K-1)*Wp, K*C_in)  kw-folded, row-halo'd input tile
    w_ref: (K, K*C_in, C_out_p)          scale-folded weights, [kh, kw*C_in+c, o]
    b_ref: (1, C_out_p)                  scale-folded f32 bias
    o_ref: (tile_rows*Wp, C_out_p)       lane-dense output tile
    """
    m = tile_rows * Wp
    # bias-initialized f32 accumulator; K matmuls over the merged (kw, C_in)
    # contraction (static, sublane-aligned row slices: kh*Wp is sub-aligned).
    acc = jnp.dot(x_ref[0:m, :], w_ref[0],
                  preferred_element_type=jnp.float32) + b_ref[...]
    for kh in range(1, K):
        xs = x_ref[kh * Wp:kh * Wp + m, :]
        acc = acc + jnp.dot(xs, w_ref[kh], preferred_element_type=jnp.float32)
    o_ref[...] = acc.astype(o_ref.dtype)


def _build_input_tiles(x_nhwc, K, pad, tile_rows, Wp):
    """kw-folded, row-halo'd tiles:
    xh[n*R + r, i*Wp + j, kw*C + c] == xpad[n, r*tile_rows + i + ?kh, j + kw, c]
    where xpad is the zero-padded ('same' conv) NHWC input.
    """
    N, H, W, C = x_nhwc.shape
    R = pl.cdiv(H, tile_rows)
    Hp = R * tile_rows
    halo = K - 1                                   # == 2*pad for odd K
    xp = jnp.pad(x_nhwc, ((0, 0),
                          (pad, pad + Hp - H),
                          (pad, pad + Wp - W),
                          (0, 0)))                 # (N, Hp+halo, Wp+halo, C)
    # fold the K horizontal (kw) taps into the channel axis -> last dim K*C.
    # TODO(synk): on v5e (lowest HBM BW) produce these shifts in-kernel with
    # pltpu.roll instead of tripling input HBM bytes for mem-bound layers.
    shifted = jnp.concatenate([xp[:, :, kw:kw + Wp, :] for kw in range(K)],
                              axis=-1)             # (N, Hp+halo, Wp, K*C)
    tiles = jnp.stack(
        [shifted[:, r * tile_rows:r * tile_rows + tile_rows + halo, :, :]
         for r in range(R)], axis=1)               # (N, R, tr+halo, Wp, K*C)
    xh = tiles.reshape(N * R, (tile_rows + halo) * Wp, K * C)
    return xh, R, Hp


def _vmem_budget_bytes():
    # Generation-aware cap: ~48 MiB on v7x (64 MiB VMEM), ~96 MiB on v5e/v6e.
    try:
        cap = pltpu.get_tpu_info().vmem_capacity_bytes
    except Exception:
        cap = 64 * 2**20
    return int(0.75 * cap)


def _pick_tile_rows(H, Wp, K, C_in, Cp, in_item, out_item, budget):
    """Largest tile_rows whose (double-buffered) tiles + resident weight fit
    the VMEM budget; target ~2K output rows-of-lanes per tile and >=8 rows so
    the (K-1)-row halo re-read stays a small fraction of input DMA."""
    def blk_bytes(t):
        halo_m = (t + K - 1) * Wp
        m = t * Wp
        return (2 * halo_m * (K * C_in) * in_item      # input tile  (x2 buffers)
                + 2 * m * Cp * out_item                # output tile (x2 buffers)
                + 2 * K * (K * C_in) * Cp * in_item    # resident weight (x2 alloc)
                + 2 * Cp * 4)                          # resident bias
    tr = min(H, max(8, 2048 // max(Wp, 1)))
    while tr > 1 and blk_bytes(tr) > budget:
        tr = max(1, tr // 2)
    # TODO(synk): if blk_bytes(1) still exceeds the budget (huge C_in*C_out
    # layers on v7x), split C_in/C_out onto an "arbitrary" grid axis with a
    # pl.when-initialized f32 accumulator scratch instead of failing here.
    return tr, blk_bytes(tr)


def constrained_conv2d(x, weight, bias, *, lr_mul=1.0, equalized=True,
                       compute_dtype=None):
    """Forward of ConstrainedLayer(nn.Conv2d(C_in, C_out, K, padding=K//2)).

    x: (N, C_in, H, W) NCHW; weight: (C_out, C_in, K, K) OIHW; bias: (C_out,).
    Returns (N, C_out, H, W) NCHW == (conv(x, W) + b) * scale with
    scale = sqrt(2 / (C_in*K*K)) * lr_mul when equalized (else 1.0).
    """
    N, C_in, H, W = x.shape
    C_out, C_in_w, K, K2 = weight.shape
    assert C_in_w == C_in and K == K2 and K % 2 == 1
    pad = K // 2

    fan_in = C_in * K * K
    scale = (math.sqrt(2.0 / fan_in) * lr_mul) if equalized else 1.0

    out_dtype = x.dtype
    cdt = jnp.dtype(compute_dtype) if compute_dtype is not None else jnp.dtype(x.dtype)
    in_item = cdt.itemsize
    out_item = jnp.dtype(out_dtype).itemsize

    # Lane / sublane geometry: output channels padded lane-dense; width padded
    # to the compute dtype's sublane packing so kh*Wp slice offsets stay aligned.
    sub = max(8, 32 // in_item)                    # 8 (f32), 16 (bf16), 32 (8-bit)
    Wp = sub * pl.cdiv(W, sub)
    Cp = 128 * pl.cdiv(C_out, 128)
    # TODO(synk): when C_out << 128 the padded channel slab wastes output HBM
    # writeback; a C_out-major (W-on-lanes) output layout would avoid it.

    budget = _vmem_budget_bytes()
    tile_rows, block_bytes = _pick_tile_rows(H, Wp, K, C_in, Cp,
                                             in_item, out_item,
                                             budget - 4 * 2**20)

    # ---- layout plumbing (input-sized, XLA-fused; no K*K im2col matrix) -----
    x_nhwc = jnp.transpose(x, (0, 2, 3, 1)).astype(cdt)       # channels -> lanes
    xh, R, Hp = _build_input_tiles(x_nhwc, K, pad, tile_rows, Wp)

    # Tiny weight reorder + equalized-lr scale folded in (f32, then cast):
    # (C_out, C_in, kh, kw) -> (kh, kw*C_in + c, C_out_p), pre-scaled.
    w9 = jnp.transpose(weight, (2, 3, 1, 0)).reshape(K, K * C_in, C_out)
    w9 = w9.astype(jnp.float32) * scale
    w9 = jnp.pad(w9, ((0, 0), (0, 0), (0, Cp - C_out))).astype(cdt)
    b2 = jnp.pad(bias.astype(jnp.float32) * scale, (0, Cp - C_out)).reshape(1, Cp)

    m = tile_rows * Wp
    halo_m = (tile_rows + K - 1) * Wp
    vmem_limit = int(min(budget, max(32 * 2**20, block_bytes + 4 * 2**20)))

    grid = (N * R,)
    # TODO(synk): if N*R < 2 (tiny feature maps), add a parallel Cp-split grid
    # axis (>=256-wide blocks on v6e/v7x) so both v7x TensorCores stay busy.

    out = pl.pallas_call(
        functools.partial(_conv_bias_kernel, K=K, tile_rows=tile_rows, Wp=Wp),
        out_shape=jax.ShapeDtypeStruct((N * R, m, Cp), out_dtype),
        grid_spec=pltpu.PrefetchScalarGridSpec(
            num_scalar_prefetch=0,
            grid=grid,
            in_specs=[
                pl.BlockSpec((None, halo_m, K * C_in), lambda g: (g, 0, 0)),
                # Constant index maps -> weight/bias are DMA'd once and stay
                # resident across the whole grid.
                # TODO(synk): single-buffer these (pipeline_mode=pl.Buffered(1))
                # to free VMEM for bigger row tiles on v7x once validated.
                pl.BlockSpec((K, K * C_in, Cp), lambda g: (0, 0, 0)),
                pl.BlockSpec((1, Cp), lambda g: (0, 0)),
            ],
            out_specs=pl.BlockSpec((None, m, Cp), lambda g: (g, 0, 0)),
        ),
        compiler_params=pltpu.CompilerParams(
            dimension_semantics=("parallel",),
            vmem_limit_bytes=vmem_limit,
        ),
    )(xh, w9, b2)

    # (N*R, tile_rows*Wp, Cp) -> (N, Hp, Wp, Cp) -> crop pads -> NCHW (PyTorch API)
    y = out.reshape(N, Hp, Wp, Cp)[:, :H, :W, :C_out]
    return jnp.transpose(y, (0, 3, 1, 2))


def reference_conv2d(x, weight, bias, scale):
    y = jax.lax.conv_general_dilated(
        x, weight, window_strides=(1, 1), padding="SAME",
        dimension_numbers=("NCHW", "OIHW", "NCHW"))
    return (y + bias.reshape(1, -1, 1, 1)) * scale


if __name__ == "__main__":
    key = jax.random.PRNGKey(0)
    kx, kw_key, kb_key = jax.random.split(key, 3)

    # Small shapes consistent with the module (Conv2d(C_in, C_out, 3, padding=1)).
    N, C_in, H, W = 2, 4, 16, 16
    C_out, K = 8, 3
    lr_mul = 1.0

    x = jax.random.normal(kx, (N, C_in, H, W), dtype=jnp.float32)
    # ConstrainedLayer.__init__: weight ~ N(0,1)/lrMul, bias = 0 (initBiasToZero).
    weight = jax.random.normal(kw_key, (C_out, C_in, K, K), dtype=jnp.float32) / lr_mul
    bias = jnp.zeros((C_out,), dtype=jnp.float32)

    scale = math.sqrt(2.0 / (C_in * K * K)) * lr_mul

    # f32 path (exact check vs a plain-JAX reference of the same math).
    y = constrained_conv2d(x, weight, bias, lr_mul=lr_mul, equalized=True)
    y = jax.block_until_ready(y)
    y_ref = reference_conv2d(x, weight, bias, scale)
    assert jnp.allclose(y, y_ref, atol=1e-4, rtol=1e-4), "f32 mismatch vs reference"

    # Nonzero-bias path (exercises the wrapper-side bias/scale folding).
    bias_nz = jax.random.normal(kb_key, (C_out,), dtype=jnp.float32)
    y_b = constrained_conv2d(x, weight, bias_nz, lr_mul=lr_mul, equalized=True)
    y_b = jax.block_until_ready(y_b)
    y_b_ref = reference_conv2d(x, weight, bias_nz, scale)
    assert jnp.allclose(y_b, y_b_ref, atol=1e-4, rtol=1e-4), "bias mismatch vs reference"

    # bf16-operand path (v6e/v7x MXU rate, f32 accumulation) -- looser tolerance.
    y_bf16 = constrained_conv2d(x, weight, bias, lr_mul=lr_mul, equalized=True,
                                compute_dtype=jnp.bfloat16)
    y_bf16 = jax.block_until_ready(y_bf16)
    assert jnp.allclose(y_bf16, y_ref, atol=1e-1, rtol=5e-2), "bf16 mismatch vs reference"

    print("KERNEL_OK")
</pallas_src>

<mosaic_0001>
module attributes {stable_mosaic.version = 11 : i64} {
  func.func @_conv_bias_kernel(%arg0: i32, %arg1: memref<1x288x12xf32, #tpu.memory_space<vmem>>, %arg2: memref<3x12x128xf32, #tpu.memory_space<vmem>>, %arg3: memref<1x128xf32, #tpu.memory_space<vmem>>, %arg4: memref<1x256x128xf32, #tpu.memory_space<vmem>>) attributes {dimension_semantics = [#tpu.dimension_semantics<parallel>], iteration_bounds = array<i64: 2>, scalar_prefetch = 0 : i64, scratch_operands = 0 : i64, tpu.core_type = #tpu.core_type<tc>, window_params = [{transform_indices = @transform_0, window_bounds = array<i64: 1, 288, 12>}, {pipeline_mode = #tpu.pipeline_mode<synchronous>, transform_indices = @transform_1, window_bounds = array<i64: 3, 12, 128>}, {pipeline_mode = #tpu.pipeline_mode<synchronous>, transform_indices = @transform_2, window_bounds = array<i64: 1, 128>}, {transform_indices = @transform_3, window_bounds = array<i64: 1, 256, 128>}]} {
    %c0 = arith.constant 0 : index
    %c0_0 = arith.constant 0 : index
    %c0_1 = arith.constant 0 : index
    %0 = vector.load %arg1[%c0, %c0_0, %c0_1] : memref<1x288x12xf32, #tpu.memory_space<vmem>>, vector<1x256x12xf32>
    %1 = vector.shape_cast %0 : vector<1x256x12xf32> to vector<256x12xf32>
    %c0_2 = arith.constant 0 : index
    %c0_3 = arith.constant 0 : index
    %c0_4 = arith.constant 0 : index
    %2 = vector.load %arg2[%c0_2, %c0_3, %c0_4] : memref<3x12x128xf32, #tpu.memory_space<vmem>>, vector<1x12x128xf32>
    %3 = vector.shape_cast %2 : vector<1x12x128xf32> to vector<12x128xf32>
    %cst = arith.constant dense<0.000000e+00> : vector<256x128xf32>
    %4 = tpu.matmul %1, %3, %cst {dimension_numbers = #tpu.dot_dimension_numbers<[1], [0], [0], [1], [0, 0, 1, 1], [], []>} : vector<256x12xf32>, vector<12x128xf32>, vector<256x128xf32> -> vector<256x128xf32>
    %c0_5 = arith.constant 0 : index
    %c0_6 = arith.constant 0 : index
    %5 = vector.load %arg3[%c0_5, %c0_6] : memref<1x128xf32, #tpu.memory_space<vmem>>, vector<1x128xf32>
    %6 = vector.broadcast %5 : vector<1x128xf32> to vector<256x128xf32>
    %7 = arith.addf %4, %6 : vector<256x128xf32>
    %c0_7 = arith.constant 0 : index
    %c16 = arith.constant 16 : index
    %c0_8 = arith.constant 0 : index
    %8 = vector.load %arg1[%c0_7, %c16, %c0_8] : memref<1x288x12xf32, #tpu.memory_space<vmem>>, vector<1x256x12xf32>
    %9 = vector.shape_cast %8 : vector<1x256x12xf32> to vector<256x12xf32>
    %c1 = arith.constant 1 : index
    %c0_9 = arith.constant 0 : index
    %c0_10 = arith.constant 0 : index
    %10 = vector.load %arg2[%c1, %c0_9, %c0_10] : memref<3x12x128xf32, #tpu.memory_space<vmem>>, vector<1x12x128xf32>
    %11 = vector.shape_cast %10 : vector<1x12x128xf32> to vector<12x128xf32>
    %cst_11 = arith.constant dense<0.000000e+00> : vector<256x128xf32>
    %12 = tpu.matmul %9, %11, %cst_11 {dimension_numbers = #tpu.dot_dimension_numbers<[1], [0], [0], [1], [0, 0, 1, 1], [], []>} : vector<256x12xf32>, vector<12x128xf32>, vector<256x128xf32> -> vector<256x128xf32>
    %13 = arith.addf %7, %12 : vector<256x128xf32>
    %c0_12 = arith.constant 0 : index
    %c32 = arith.constant 32 : index
    %c0_13 = arith.constant 0 : index
    %14 = vector.load %arg1[%c0_12, %c32, %c0_13] : memref<1x288x12xf32, #tpu.memory_space<vmem>>, vector<1x256x12xf32>
    %15 = vector.shape_cast %14 : vector<1x256x12xf32> to vector<256x12xf32>
    %c2 = arith.constant 2 : index
    %c0_14 = arith.constant 0 : index
    %c0_15 = arith.constant 0 : index
    %16 = vector.load %arg2[%c2, %c0_14, %c0_15] : memref<3x12x128xf32, #tpu.memory_space<vmem>>, vector<1x12x128xf32>
    %17 = vector.shape_cast %16 : vector<1x12x128xf32> to vector<12x128xf32>
    %cst_16 = arith.constant dense<0.000000e+00> : vector<256x128xf32>
    %18 = tpu.matmul %15, %17, %cst_16 {dimension_numbers = #tpu.dot_dimension_numbers<[1], [0], [0], [1], [0, 0, 1, 1], [], []>} : vector<256x12xf32>, vector<12x128xf32>, vector<256x128xf32> -> vector<256x128xf32>
    %19 = arith.addf %13, %18 : vector<256x128xf32>
    %c0_17 = arith.constant 0 : index
    %c0_18 = arith.constant 0 : index
    %c0_19 = arith.constant 0 : index
    %20 = vector.load %arg4[%c0_17, %c0_18, %c0_19] : memref<1x256x128xf32, #tpu.memory_space<vmem>>, vector<1x256x128xf32>
    %21 = vector.shape_cast %20 : vector<1x256x128xf32> to vector<256x128xf32>
    %22 = vector.shape_cast %19 : vector<256x128xf32> to vector<1x256x128xf32>
    tpu.vector_store %arg4[%c0_17, %c0_18, %c0_19], %22 {strides = array<i32>} : memref<1x256x128xf32, #tpu.memory_space<vmem>>, vector<1x256x128xf32>,
    return
  }
  func.func @transform_0(%arg0: i32) -> (i32, i32, i32) {
    %c0_i32 = arith.constant 0 : i32
    %c0_i32_0 = arith.constant 0 : i32
    %c0_i32_1 = arith.constant 0 : i32
    return %arg0, %c0_i32, %c0_i32_0 : i32, i32, i32
  }
  func.func @transform_1(%arg0: i32) -> (i32, i32, i32) {
    %c0_i32 = arith.constant 0 : i32
    %c0_i32_0 = arith.constant 0 : i32
    %c0_i32_1 = arith.constant 0 : i32
    %c0_i32_2 = arith.constant 0 : i32
    return %c0_i32, %c0_i32_0, %c0_i32_1 : i32, i32, i32
  }
  func.func @transform_2(%arg0: i32) -> (i32, i32) {
    %c0_i32 = arith.constant 0 : i32
    %c0_i32_0 = arith.constant 0 : i32
    %c0_i32_1 = arith.constant 0 : i32
    return %c0_i32, %c0_i32_0 : i32, i32
  }
  func.func @transform_3(%arg0: i32) -> (i32, i32, i32) {
    %c0_i32 = arith.constant 0 : i32
    %c0_i32_0 = arith.constant 0 : i32
    %c0_i32_1 = arith.constant 0 : i32
    return %arg0, %c0_i32, %c0_i32_0 : i32, i32, i32
  }
}

</mosaic_0001>

<llo_original>
// kernel: tpu_custom_call.1
$region0: #{tpu_custom_call.1}
  #allocation0 [shape = 'u32[]', space=smem, size = 0x4, offset = 0x4, fixed_abs, tag = 'smem constant byte address 0x4 - core index']
  #allocation1 [shape = 'u32[144,128]{1,0:T(1,128)}', space=vmem, size = 0x12000, scoped, tag = 'internal scratch']
  %s0 = inlined_call_operand.vmem [shape: f32[2,288,12], index: 0, kind: input, shape index: {}]
  %s1 = inlined_call_operand.vmem [shape: f32[3,12,128], index: 1, kind: input, shape index: {}]
  %s2 = inlined_call_operand.vmem [shape: f32[1,128], index: 2, kind: input, shape index: {}]
  %s3 = inlined_call_operand.hbm [shape: f32[2,256,128], index: 3, kind: output, shape index: {}]
  %s4 = sld [smem:[#allocation0]]
  $region45: #{tpu_custom_call.1} parent=0
    _
  %s6 = ssub.s32 1, %s4
  %s7 = scalar_select 0, %s6, %s4
  $region1: #{tpu_custom_call.1} parent=0
    #allocation2 [shape = 'u8[262144]{0}', space=vmem, size = 0x40000, scoped, tag = 'output window, operand 0']
    #allocation3 [shape = 's32[2]{0}', space=sflag, size = 0x8, scoped, tag = 'scoped memory for tpu_custom_call.1']
    %8 = vsyncpa [#allocation3], 0
    %s9 = scalar_lea.sflag [#allocation3], 1
    %10 = vsyncpa %s9, 0
    loop: start=0, step=1, limit=4
    $region2: #{tpu_custom_call.1} parent=1 // loop_pre_header
      _
    $region3: #{tpu_custom_call.1} parent=1 // loop_header
      %s12 = sphi 0, %s16
      %p13 = scmp.ge.s32.totalorder %s12, 4
      %s22 = sphi 0, %s24
      %s25 = sphi 0, %s22
      %s26 = sphi 0, %s25
      %s42 = sphi 0, %s26
      %s46 = sphi 0, %s46
      %s48 = sphi 0, %s46
      %s49 = sphi 0, %s48
      %s63 = sphi 0, %s49
      %s67 = sphi 0, %s67
      %s69 = sphi 0, %s67
      %s70 = sphi 0, %s69
      %s84 = sphi 0, %s70
      %s90 = sphi 0, %s92
      %s93 = sphi 0, %s90
      %s94 = sphi 0, %s93
      %s110 = sphi 0, %s94
    $region4: #{tpu_custom_call.1} parent=1 // loop_header_branch
      %15 = sbr.rel (%p13) target = $region8
    $region5: #{tpu_custom_call.1} parent=1 // loop_body
      %s17 = ssub.s32 %s12, 1
      %s18 = ssub.s32 %s12, 2
      %s19 = sadd.s32 %s12, 1
      %s20 = ssub.s32 %s12, %s19
      %p21 = scmp.eq.s32.totalorder %s20, 0
      %s23 = sadd.s32 %s22, 1
      %s24 = scalar_select %p21, %s22, %s23
      %p27 = pneg %p21
      %p28 = scmp.eq.s32.totalorder %s12, 1
      %p29 = por %p27, %p28
      %p30 = scmp.ne.s32.totalorder %s22, %s25
      %p31 = scmp.eq.s32.totalorder %s12, 0
      %p32 = por %p30, %p31
      %p33 = scmp.ne.s32.totalorder %s22, %s25
      %p34 = scmp.eq.s32.totalorder %s17, 1
      %p35 = por %p33, %p34
      %p36 = scmp.ne.s32.totalorder %s25, %s26
      %p37 = scmp.eq.s32.totalorder %s17, 0
      %p38 = por %p36, %p37
      %p39 = scmp.ne.s32.totalorder %s25, %s26
      %p40 = scmp.eq.s32.totalorder %s18, 1
      %p41 = por %p39, %p40
      %p43 = scmp.ne.s32.totalorder %s26, %s42
      %p44 = scmp.eq.s32.totalorder %s18, 0
      %p45 = por %p43, %p44
      %s47 = sadd.s32 %s46, 1
      %p50 = scmp.eq.s32.totalorder %s12, 1
      %p51 = scmp.ne.s32.totalorder %s46, %s48
      %p52 = scmp.eq.s32.totalorder %s12, 0
      %p53 = por %p51, %p52
      %p54 = scmp.ne.s32.totalorder %s46, %s48
      %p55 = scmp.eq.s32.totalorder %s17, 1
      %p56 = por %p54, %p55
      %p57 = scmp.ne.s32.totalorder %s48, %s49
      %p58 = scmp.eq.s32.totalorder %s17, 0
      %p59 = por %p57, %p58
      %p60 = scmp.ne.s32.totalorder %s48, %s49
      %p61 = scmp.eq.s32.totalorder %s18, 1
      %p62 = por %p60, %p61
      %p64 = scmp.ne.s32.totalorder %s49, %s63
      %p65 = scmp.eq.s32.totalorder %s18, 0
      %p66 = por %p64, %p65
      %s68 = sadd.s32 %s67, 1
      %p71 = scmp.eq.s32.totalorder %s12, 1
      %p72 = scmp.ne.s32.totalorder %s67, %s69
      %p73 = scmp.eq.s32.totalorder %s12, 0
      %p74 = por %p72, %p73
      %p75 = scmp.ne.s32.totalorder %s67, %s69
      %p76 = scmp.eq.s32.totalorder %s17, 1
      %p77 = por %p75, %p76
      %p78 = scmp.ne.s32.totalorder %s69, %s70
      %p79 = scmp.eq.s32.totalorder %s17, 0
      %p80 = por %p78, %p79
      %p81 = scmp.ne.s32.totalorder %s69, %s70
      %p82 = scmp.eq.s32.totalorder %s18, 1
      %p83 = por %p81, %p82
      %p85 = scmp.ne.s32.totalorder %s70, %s84
      %p86 = scmp.eq.s32.totalorder %s18, 0
      %p87 = por %p85, %p86
      %s88 = ssub.s32 %s12, %s19
      %p89 = scmp.eq.s32.totalorder %s88, 0
      %s91 = sadd.s32 %s90, 1
      %s92 = scalar_select %p89, %s90, %s91
      %p95 = pneg %p89
      %p96 = scmp.eq.s32.totalorder %s12, 1
      %p97 = por %p95, %p96
      %p98 = scmp.ne.s32.totalorder %s90, %s93
      %p99 = scmp.eq.s32.totalorder %s12, 0
      %p100 = por %p98, %p99
      %p101 = scmp.ne.s32.totalorder %s90, %s93
      %p102 = scmp.eq.s32.totalorder %s17, 1
      %p103 = por %p101, %p102
      %p104 = scmp.ne.s32.totalorder %s93, %s94
      %p105 = scmp.eq.s32.totalorder %s17, 0
      %p106 = por %p104, %p105
      %p107 = scmp.ne.s32.totalorder %s93, %s94
      %p108 = scmp.eq.s32.totalorder %s18, 1
      %p109 = por %p107, %p108
      %p111 = scmp.ne.s32.totalorder %s94, %s110
      %p112 = scmp.eq.s32.totalorder %s18, 0
      %p113 = por %p111, %p112
      %p114 = scmp.le.s32.totalorder 1, %s12
      %p115 = scmp.lt.s32.totalorder %s12, 3
      %p116 = pnand %p114, %p115
      %p117 = pneg %p116
      // Predicated region
      $region9: #{tpu_custom_call.1} parent=5 // pred_check
        _
      $region10: #{tpu_custom_call.1} parent=5 // pred_check_branch
        %119 = sbr.rel (%p116) target = $region12
      $region11: #{tpu_custom_call.1} parent=5 // pred_region
        %s120 = ssub.s32 %s12, 1
        // Predicated region
        $region13: #{tpu_custom_call.1} parent=11 // pred_check
          %p121 = pneg %p59
        $region14: #{tpu_custom_call.1} parent=11 // pred_check_branch
          %123 = sbr.rel (%p121) target = $region16
        $region15: #{tpu_custom_call.1} parent=11 // pred_region
          _
        $region16: #{tpu_custom_call.1} parent=11 // pred_fallthru
          _
        // Predicated region
        $region17: #{tpu_custom_call.1} parent=11 // pred_check
          %p124 = pneg %p80
        $region18: #{tpu_custom_call.1} parent=11 // pred_check_branch
          %126 = sbr.rel (%p124) target = $region20
        $region19: #{tpu_custom_call.1} parent=11 // pred_region
          _
        $region20: #{tpu_custom_call.1} parent=11 // pred_fallthru
          _
      $region12: #{tpu_custom_call.1} parent=5 // pred_fallthru
        _
      %p127 = scmp.lt.s32.totalorder %s12, 2
      // Predicated region
      $region21: #{tpu_custom_call.1} parent=5 // pred_check
        %p128 = pneg %p127
      $region22: #{tpu_custom_call.1} parent=5 // pred_check_branch
        %130 = sbr.rel (%p128) target = $region24
      $region23: #{tpu_custom_call.1} parent=5 // pred_region
        // Predicated region
        $region25: #{tpu_custom_call.1} parent=23 // pred_check
          %p131 = pneg %p32
        $region26: #{tpu_custom_call.1} parent=23 // pred_check_branch
          %133 = sbr.rel (%p131) target = $region28
        $region27: #{tpu_custom_call.1} parent=23 // pred_region
          %p134 = scmp.lt.s32.totalorder %s12, 1
          %s135 = scalar_select %p134, %s12, 1
          %s136 = smul.addr %s135, 36
          %s137 = smul.addr %s136, 8
          %s138 = scalar_lea.vmem %s0, %s137
        $region28: #{tpu_custom_call.1} parent=23 // pred_fallthru
          _
      $region24: #{tpu_custom_call.1} parent=5 // pred_fallthru
        _
      %p139 = scmp.le.s32.totalorder 1, %s12
      %p140 = scmp.lt.s32.totalorder %s12, 3
      %p141 = pnand %p139, %p140
      %p142 = pneg %p141
      // Predicated region
      $region29: #{tpu_custom_call.1} parent=5 // pred_check
        _
      $region30: #{tpu_custom_call.1} parent=5 // pred_check_branch
        %144 = sbr.rel (%p141) target = $region32
      $region31: #{tpu_custom_call.1} parent=5 // pred_region
        %s145 = ssub.s32 %s12, 1
        %p146 = scmp.lt.s32.totalorder %s17, 1
        %s147 = scalar_select %p146, %s17, 1
        %s148 = smul.addr %s147, 36
        %s149 = smul.addr %s148, 8
        %s150 = scalar_lea.vmem %s0, %s149
        %p151 = pneg %p38
        %p152 = pneg %p35
        %p153 = pneg %p59
        %p154 = pneg %p56
        %p155 = pneg %p80
        %p156 = pneg %p77
        %p157 = pneg %p106
        %p158 = pneg %p103
        %s159 = sand.u32 %s93, 1
        %s160 = scalar_lea.sflag [#allocation3], %s159
        %s161 = sand.u32 %s93, 1
        %s162 = smul.addr %s161, 256
        %s163 = scalar_lea.vmem [#allocation2], %s162
        %p164 = scmp.lt.s32.totalorder %s17, 1
        %s165 = scalar_select %p164, %s17, 1
        %s166 = smul.addr %s165, 36
        %s167 = smul.addr %s166, 8
        %s168 = scalar_lea.vmem %s0, %s167
        %v169 = vld [vmem:[%s168] sm:$0xff]
        %v170 = vld [vmem:[%s168 + $0x8] sm:$0xff]
        %v171 = vld [vmem:[%s168 + $0x10] sm:$0xff]
        %v172 = vld [vmem:[%s168 + $0x18] sm:$0xff]
        %v173 = vld [vmem:[%s168 + $0x20] sm:$0xff]
        %v174 = vld [vmem:[%s168 + $0x28] sm:$0xff]
        %v175 = vld [vmem:[%s168 + $0x30] sm:$0xff]
        %v176 = vld [vmem:[%s168 + $0x38] sm:$0xff]
        %v177 = vld [vmem:[%s168 + $0x40] sm:$0xff]
        %v178 = vld [vmem:[%s168 + $0x48] sm:$0xff]
        %v179 = vld [vmem:[%s168 + $0x50] sm:$0xff]
        %v180 = vld [vmem:[%s168 + $0x58] sm:$0xff]
        %v181 = vld [vmem:[%s168 + $0x60] sm:$0xff]
        %v182 = vld [vmem:[%s168 + $0x68] sm:$0xff]
        %v183 = vld [vmem:[%s168 + $0x70] sm:$0xff]
        %v184 = vld [vmem:[%s168 + $0x78] sm:$0xff]
        %v185 = vld [vmem:[%s168 + $0x80] sm:$0xff]
        %v186 = vld [vmem:[%s168 + $0x88] sm:$0xff]
        %v187 = vld [vmem:[%s168 + $0x90] sm:$0xff]
        %v188 = vld [vmem:[%s168 + $0x98] sm:$0xff]
        %v189 = vld [vmem:[%s168 + $0xa0] sm:$0xff]
        %v190 = vld [vmem:[%s168 + $0xa8] sm:$0xff]
        %v191 = vld [vmem:[%s168 + $0xb0] sm:$0xff]
        %v192 = vld [vmem:[%s168 + $0xb8] sm:$0xff]
        %v193 = vld [vmem:[%s168 + $0xc0] sm:$0xff]
        %v194 = vld [vmem:[%s168 + $0xc8] sm:$0xff]
        %v195 = vld [vmem:[%s168 + $0xd0] sm:$0xff]
        %v196 = vld [vmem:[%s168 + $0xd8] sm:$0xff]
        %v197 = vld [vmem:[%s168 + $0xe0] sm:$0xff]
        %v198 = vld [vmem:[%s168 + $0xe8] sm:$0xff]
        %v199 = vld [vmem:[%s168 + $0xf0] sm:$0xff]
        %v200 = vld [vmem:[%s168 + $0xf8] sm:$0xff]
        %v201 = vld [vmem:[%s1] sm:$0xff]
        %v202 = vld [vmem:[%s1 + $0x8] sm:$0xf]
        %v203 = vld [vmem:[%s2] sm:$0x1]
        %v205 = vlaneseq
        %v206 = vshrl.u32 %v205, 7
        %v207 = vsub.s32 0, %v206
        %v208 = vrot.slane %v203, %v207
        %vm210 = vcmask 97280
        %v212 = vsel %vm210, %v169, 0
        %v215 = vsel %vm210, %v170, 0
        %v218 = vsel %vm210, %v171, 0
        %v221 = vsel %vm210, %v172, 0
        %v224 = vsel %vm210, %v173, 0
        %v227 = vsel %vm210, %v174, 0
        %v230 = vsel %vm210, %v175, 0
        %v233 = vsel %vm210, %v176, 0
        %v236 = vsel %vm210, %v177, 0
        %v239 = vsel %vm210, %v178, 0
        %v242 = vsel %vm210, %v179, 0
        %v245 = vsel %vm210, %v180, 0
        %v248 = vsel %vm210, %v181, 0
        %v251 = vsel %vm210, %v182, 0
        %v254 = vsel %vm210, %v183, 0
        %v257 = vsel %vm210, %v184, 0
        %v260 = vsel %vm210, %v185, 0
        %v263 = vsel %vm210, %v186, 0
        %v266 = vsel %vm210, %v187, 0
        %v269 = vsel %vm210, %v188, 0
        %v272 = vsel %vm210, %v189, 0
        %v275 = vsel %vm210, %v190, 0
        %v278 = vsel %vm210, %v191, 0
        %v281 = vsel %vm210, %v192, 0
        %v284 = vsel %vm210, %v193, 0
        %v287 = vsel %vm210, %v194, 0
        %v290 = vsel %vm210, %v195, 0
        %v293 = vsel %vm210, %v196, 0
        %v296 = vsel %vm210, %v197, 0
        %v299 = vsel %vm210, %v198, 0
        %v302 = vsel %vm210, %v199, 0
        %v305 = vsel %vm210, %v200, 0
        %vm307 = vcmask 1043456
        %v309 = vsel %vm307, %v202, 0
        %311 = vmatprep.subr.mxu0 0.0
        %312 = vmatpush1.msra.mxu0 %v201
        %313 = vmatprep.subr.mxu0 0.0
        %314 = vmatpush1.msra.mxu0 %v309
        %315 = vmatprep.subr.mxu0 0.0
        %316 = vmatpush1.msra.mxu0 0.0
        %317 = vmatprep.subr.mxu0 0.0
        %318 = vmatpush1.msra.mxu0 0.0
        %319 = vmatprep.subr.mxu0 0.0
        %320 = vmatpush1.msra.mxu0 0.0
        %321 = vmatprep.subr.mxu0 0.0
        %322 = vmatpush1.msra.mxu0 0.0
        %323 = vmatprep.subr.mxu0 0.0
        %324 = vmatpush1.msra.mxu0 0.0
        %325 = vmatprep.subr.mxu0 0.0
        %326 = vmatpush1.msra.mxu0 0.0
        %327 = vmatprep.subr.mxu0 0.0
        %328 = vmatpush1.msra.mxu0 0.0
        %329 = vmatprep.subr.mxu0 0.0
        %330 = vmatpush1.msra.mxu0 0.0
        %331 = vmatprep.subr.mxu0 0.0
        %332 = vmatpush1.msra.mxu0 0.0
        %333 = vmatprep.subr.mxu0 0.0
        %334 = vmatpush1.msra.mxu0 0.0
        %335 = vmatprep.subr.mxu0 0.0
        %336 = vmatpush1.msra.mxu0 0.0
        %337 = vmatprep.subr.mxu0 0.0
        %338 = vmatpush1.msra.mxu0 0.0
        %339 = vmatprep.subr.mxu0 0.0
        %340 = vmatpush1.msra.mxu0 0.0
        %341 = vmatprep.subr.mxu0 0.0
        %342 = vmatpush1.msra.mxu0 0.0
        %343 = vmatprep.subr.mxu0 0.0
        %344 = vmatpush1.msra.mxu0 0.0
        %345 = vmatprep.subr.mxu0 0.0
        %346 = vmatpush1.msra.mxu0 0.0
        %347 = vmatprep.subr.mxu0 0.0
        %348 = vmatpush1.msra.mxu0 0.0
        %349 = vmatprep.subr.mxu0 0.0
        %350 = vmatpush1.msra.mxu0 0.0
        %351 = vmatprep.subr.mxu0 0.0
        %352 = vmatpush1.msra.mxu0 0.0
        %353 = vmatprep.subr.mxu0 0.0
        %354 = vmatpush1.msra.mxu0 0.0
        %355 = vmatprep.subr.mxu0 0.0
        %356 = vmatpush1.msra.mxu0 0.0
        %357 = vmatprep.subr.mxu0 0.0
        %358 = vmatpush1.msra.mxu0 0.0
        %359 = vmatprep.subr.mxu0 0.0
        %360 = vmatpush1.msra.mxu0 0.0
        %361 = vmatprep.subr.mxu0 0.0
        %362 = vmatpush1.msra.mxu0 0.0
        %363 = vmatprep.subr.mxu0 0.0
        %364 = vmatpush1.msra.mxu0 0.0
        %365 = vmatprep.subr.mxu0 0.0
        %366 = vmatpush1.msra.mxu0 0.0
        %367 = vmatprep.subr.mxu0 0.0
        %368 = vmatpush1.msra.mxu0 0.0
        %369 = vmatprep.subr.mxu0 0.0
        %370 = vmatpush1.msra.mxu0 0.0
        %371 = vmatprep.subr.mxu0 0.0
        %372 = vmatpush1.msra.mxu0 0.0
        %373 = vmatprep.subr.mxu0 0.0
        %374 = vmatpush1.msra.mxu0 0.0
        %375 = vmatprep.mubr.f32.mxu0 0.0
        %376 = vmatmul.mubr.f32.gmra.mrb[0].mxu0 %v212
        %v377 = vpop.f32.mrb[0].mxu0
        %v378 = vadd.f32 %v208, %v377
        %v379 = vpop.f32.mrb[0].mxu0
        %380 = vmatprep.mubr.f32.mxu0 0.0
        %381 = vmatmul.mubr.f32.gmra.mrb[0].mxu0 %v215
        %v382 = vpop.f32.mrb[0].mxu0
        %v383 = vadd.f32 %v208, %v382
        %v384 = vpop.f32.mrb[0].mxu0
        %385 = vmatprep.mubr.f32.mxu0 0.0
        %386 = vmatmul.mubr.f32.gmra.mrb[0].mxu0 %v218
        %v387 = vpop.f32.mrb[0].mxu0
        %v388 = vadd.f32 %v208, %v387
        %v389 = vpop.f32.mrb[0].mxu0
        %390 = vmatprep.mubr.f32.mxu0 0.0
        %391 = vmatmul.mubr.f32.gmra.mrb[0].mxu0 %v221
        %v392 = vpop.f32.mrb[0].mxu0
        %v393 = vadd.f32 %v208, %v392
        %v394 = vpop.f32.mrb[0].mxu0
        %395 = vmatprep.mubr.f32.mxu0 0.0
        %396 = vmatmul.mubr.f32.gmra.mrb[0].mxu0 %v224
        %v397 = vpop.f32.mrb[0].mxu0
        %v398 = vadd.f32 %v208, %v397
        %v399 = vpop.f32.mrb[0].mxu0
        %400 = vmatprep.mubr.f32.mxu0 0.0
        %401 = vmatmul.mubr.f32.gmra.mrb[0].mxu0 %v227
        %v402 = vpop.f32.mrb[0].mxu0
        %v403 = vadd.f32 %v208, %v402
        %v404 = vpop.f32.mrb[0].mxu0
        %405 = vmatprep.mubr.f32.mxu0 0.0
        %406 = vmatmul.mubr.f32.gmra.mrb[0].mxu0 %v230
        %v407 = vpop.f32.mrb[0].mxu0
        %v408 = vadd.f32 %v208, %v407
        %v409 = vpop.f32.mrb[0].mxu0
        %410 = vmatprep.mubr.f32.mxu0 0.0
        %411 = vmatmul.mubr.f32.gmra.mrb[0].mxu0 %v233
        %v412 = vpop.f32.mrb[0].mxu0
        %v413 = vadd.f32 %v208, %v412
        %v414 = vpop.f32.mrb[0].mxu0
        %415 = vmatprep.mubr.f32.mxu0 0.0
        %416 = vmatmul.mubr.f32.gmra.mrb[0].mxu0 %v236
        %v417 = vpop.f32.mrb[0].mxu0
        %v418 = vadd.f32 %v208, %v417
        %v419 = vpop.f32.mrb[0].mxu0
        %420 = vmatprep.mubr.f32.mxu0 0.0
        %421 = vmatmul.mubr.f32.gmra.mrb[0].mxu0 %v239
        %v422 = vpop.f32.mrb[0].mxu0
        %v423 = vadd.f32 %v208, %v422
        %v424 = vpop.f32.mrb[0].mxu0
        %425 = vmatprep.mubr.f32.mxu0 0.0
        %426 = vmatmul.mubr.f32.gmra.mrb[0].mxu0 %v242
        %v427 = vpop.f32.mrb[0].mxu0
        %v428 = vadd.f32 %v208, %v427
        %v429 = vpop.f32.mrb[0].mxu0
        %430 = vmatprep.mubr.f32.mxu0 0.0
        %431 = vmatmul.mubr.f32.gmra.mrb[0].mxu0 %v245
        %v432 = vpop.f32.mrb[0].mxu0
        %v433 = vadd.f32 %v208, %v432
        %v434 = vpop.f32.mrb[0].mxu0
        %435 = vmatprep.mubr.f32.mxu0 0.0
        %436 = vmatmul.mubr.f32.gmra.mrb[0].mxu0 %v248
        %v437 = vpop.f32.mrb[0].mxu0
        %v438 = vadd.f32 %v208, %v437
        %v439 = vpop.f32.mrb[0].mxu0
        %440 = vmatprep.mubr.f32.mxu0 0.0
        %441 = vmatmul.mubr.f32.gmra.mrb[0].mxu0 %v251
        %v442 = vpop.f32.mrb[0].mxu0
        %v443 = vadd.f32 %v208, %v442
        %v444 = vpop.f32.mrb[0].mxu0
        %445 = vmatprep.mubr.f32.mxu0 0.0
        %446 = vmatmul.mubr.f32.gmra.mrb[0].mxu0 %v254
        %v447 = vpop.f32.mrb[0].mxu0
        %v448 = vadd.f32 %v208, %v447
        %v449 = vpop.f32.mrb[0].mxu0
        %450 = vmatprep.mubr.f32.mxu0 0.0
        %451 = vmatmul.mubr.f32.gmra.mrb[0].mxu0 %v257
        %v452 = vpop.f32.mrb[0].mxu0
        %v453 = vadd.f32 %v208, %v452
        %v454 = vpop.f32.mrb[0].mxu0
        %455 = vmatprep.mubr.f32.mxu0 0.0
        %456 = vmatmul.mubr.f32.gmra.mrb[0].mxu0 %v260
        %v457 = vpop.f32.mrb[0].mxu0
        %v458 = vadd.f32 %v208, %v457
        %v459 = vpop.f32.mrb[0].mxu0
        %460 = vmatprep.mubr.f32.mxu0 0.0
        %461 = vmatmul.mubr.f32.gmra.mrb[0].mxu0 %v263
        %v462 = vpop.f32.mrb[0].mxu0
        %v463 = vadd.f32 %v208, %v462
        %v464 = vpop.f32.mrb[0].mxu0
        %465 = vmatprep.mubr.f32.mxu0 0.0
        %466 = vmatmul.mubr.f32.gmra.mrb[0].mxu0 %v266
        %v467 = vpop.f32.mrb[0].mxu0
        %v468 = vadd.f32 %v208, %v467
        %v469 = vpop.f32.mrb[0].mxu0
        %470 = vmatprep.mubr.f32.mxu0 0.0
        %471 = vmatmul.mubr.f32.gmra.mrb[0].mxu0 %v269
        %v472 = vpop.f32.mrb[0].mxu0
        %v473 = vadd.f32 %v208, %v472
        %v474 = vpop.f32.mrb[0].mxu0
        %475 = vmatprep.mubr.f32.mxu0 0.0
        %476 = vmatmul.mubr.f32.gmra.mrb[0].mxu0 %v272
        %v477 = vpop.f32.mrb[0].mxu0
        %v478 = vadd.f32 %v208, %v477
        %v479 = vpop.f32.mrb[0].mxu0
        %480 = vmatprep.mubr.f32.mxu0 0.0
        %481 = vmatmul.mubr.f32.gmra.mrb[0].mxu0 %v275
        %v482 = vpop.f32.mrb[0].mxu0
        %v483 = vadd.f32 %v208, %v482
        %v484 = vpop.f32.mrb[0].mxu0
        %485 = vmatprep.mubr.f32.mxu0 0.0
        %486 = vmatmul.mubr.f32.gmra.mrb[0].mxu0 %v278
        %v487 = vpop.f32.mrb[0].mxu0
        %v488 = vadd.f32 %v208, %v487
        %v489 = vpop.f32.mrb[0].mxu0
        %490 = vmatprep.mubr.f32.mxu0 0.0
        %491 = vmatmul.mubr.f32.gmra.mrb[0].mxu0 %v281
        %v492 = vpop.f32.mrb[0].mxu0
        %v493 = vadd.f32 %v208, %v492
        %v494 = vpop.f32.mrb[0].mxu0
        %495 = vmatprep.mubr.f32.mxu0 0.0
        %496 = vmatmul.mubr.f32.gmra.mrb[0].mxu0 %v284
        %v497 = vpop.f32.mrb[0].mxu0
        %v498 = vadd.f32 %v208, %v497
        %v499 = vpop.f32.mrb[0].mxu0
        %500 = vmatprep.mubr.f32.mxu0 0.0
        %501 = vmatmul.mubr.f32.gmra.mrb[0].mxu0 %v287
        %v502 = vpop.f32.mrb[0].mxu0
        %v503 = vadd.f32 %v208, %v502
        %v504 = vpop.f32.mrb[0].mxu0
        %505 = vmatprep.mubr.f32.mxu0 0.0
        %506 = vmatmul.mubr.f32.gmra.mrb[0].mxu0 %v290
        %v507 = vpop.f32.mrb[0].mxu0
        %v508 = vadd.f32 %v208, %v507
        %v509 = vpop.f32.mrb[0].mxu0
        %510 = vmatprep.mubr.f32.mxu0 0.0
        %511 = vmatmul.mubr.f32.gmra.mrb[0].mxu0 %v293
        %v512 = vpop.f32.mrb[0].mxu0
        %v513 = vadd.f32 %v208, %v512
        %v514 = vpop.f32.mrb[0].mxu0
        %515 = vmatprep.mubr.f32.mxu0 0.0
        %516 = vmatmul.mubr.f32.gmra.mrb[0].mxu0 %v296
        %v517 = vpop.f32.mrb[0].mxu0
        %v518 = vadd.f32 %v208, %v517
        %v519 = vpop.f32.mrb[0].mxu0
        %520 = vmatprep.mubr.f32.mxu0 0.0
        %521 = vmatmul.mubr.f32.gmra.mrb[0].mxu0 %v299
        %v522 = vpop.f32.mrb[0].mxu0
        %v523 = vadd.f32 %v208, %v522
        %v524 = vpop.f32.mrb[0].mxu0
        %525 = vmatprep.mubr.f32.mxu0 0.0
        %526 = vmatmul.mubr.f32.gmra.mrb[0].mxu0 %v302
        %v527 = vpop.f32.mrb[0].mxu0
        %v528 = vadd.f32 %v208, %v527
        %v529 = vpop.f32.mrb[0].mxu0
        %530 = vmatprep.mubr.f32.mxu0 0.0
        %531 = vmatmul.mubr.f32.gmra.mrb[0].mxu0 %v305
        %v532 = vpop.f32.mrb[0].mxu0
        %v533 = vadd.f32 %v208, %v532
        %v534 = vpop.f32.mrb[0].mxu0
        %535 = vdwg.mxu0
        %v536 = vld [vmem:[%s168 + $0x10] sm:$0xff]
        %v537 = vld [vmem:[%s168 + $0x18] sm:$0xff]
        %v538 = vld [vmem:[%s168 + $0x20] sm:$0xff]
        %v539 = vld [vmem:[%s168 + $0x28] sm:$0xff]
        %v540 = vld [vmem:[%s168 + $0x30] sm:$0xff]
        %v541 = vld [vmem:[%s168 + $0x38] sm:$0xff]
        %v542 = vld [vmem:[%s168 + $0x40] sm:$0xff]
        %v543 = vld [vmem:[%s168 + $0x48] sm:$0xff]
        %v544 = vld [vmem:[%s168 + $0x50] sm:$0xff]
        %v545 = vld [vmem:[%s168 + $0x58] sm:$0xff]
        %v546 = vld [vmem:[%s168 + $0x60] sm:$0xff]
        %v547 = vld [vmem:[%s168 + $0x68] sm:$0xff]
        %v548 = vld [vmem:[%s168 + $0x70] sm:$0xff]
        %v549 = vld [vmem:[%s168 + $0x78] sm:$0xff]
        %v550 = vld [vmem:[%s168 + $0x80] sm:$0xff]
        %v551 = vld [vmem:[%s168 + $0x88] sm:$0xff]
        %v552 = vld [vmem:[%s168 + $0x90] sm:$0xff]
        %v553 = vld [vmem:[%s168 + $0x98] sm:$0xff]
        %v554 = vld [vmem:[%s168 + $0xa0] sm:$0xff]
        %v555 = vld [vmem:[%s168 + $0xa8] sm:$0xff]
        %v556 = vld [vmem:[%s168 + $0xb0] sm:$0xff]
        %v557 = vld [vmem:[%s168 + $0xb8] sm:$0xff]
        %v558 = vld [vmem:[%s168 + $0xc0] sm:$0xff]
        %v559 = vld [vmem:[%s168 + $0xc8] sm:$0xff]
        %v560 = vld [vmem:[%s168 + $0xd0] sm:$0xff]
        %v561 = vld [vmem:[%s168 + $0xd8] sm:$0xff]
        %v562 = vld [vmem:[%s168 + $0xe0] sm:$0xff]
        %v563 = vld [vmem:[%s168 + $0xe8] sm:$0xff]
        %v564 = vld [vmem:[%s168 + $0xf0] sm:$0xff]
        %v565 = vld [vmem:[%s168 + $0xf8] sm:$0xff]
        %v566 = vld [vmem:[%s168 + $0x100] sm:$0xff]
        %v567 = vld [vmem:[%s168 + $0x108] sm:$0xff]
        %s568 = scalar_lea.vmem %s1, 16
        %v569 = vld [vmem:[%s568] sm:$0xff]
        %v570 = vld [vmem:[%s568 + $0x8] sm:$0xf]
        %v572 = vsel %vm210, %v536, 0
        %v575 = vsel %vm210, %v537, 0
        %v578 = vsel %vm210, %v538, 0
        %v581 = vsel %vm210, %v539, 0
        %v584 = vsel %vm210, %v540, 0
        %v587 = vsel %vm210, %v541, 0
        %v590 = vsel %vm210, %v542, 0
        %v593 = vsel %vm210, %v543, 0
        %v596 = vsel %vm210, %v544, 0
        %v599 = vsel %vm210, %v545, 0
        %v602 = vsel %vm210, %v546, 0
        %v605 = vsel %vm210, %v547, 0
        %v608 = vsel %vm210, %v548, 0
        %v611 = vsel %vm210, %v549, 0
        %v614 = vsel %vm210, %v550, 0
        %v617 = vsel %vm210, %v551, 0
        %v620 = vsel %vm210, %v552, 0
        %v623 = vsel %vm210, %v553, 0
        %v626 = vsel %vm210, %v554, 0
        %v629 = vsel %vm210, %v555, 0
        %v632 = vsel %vm210, %v556, 0
        %v635 = vsel %vm210, %v557, 0
        %v638 = vsel %vm210, %v558, 0
        %v641 = vsel %vm210, %v559, 0
        %v644 = vsel %vm210, %v560, 0
        %v647 = vsel %vm210, %v561, 0
        %v650 = vsel %vm210, %v562, 0
        %v653 = vsel %vm210, %v563, 0
        %v656 = vsel %vm210, %v564, 0
        %v659 = vsel %vm210, %v565, 0
        %v662 = vsel %vm210, %v566, 0
        %v665 = vsel %vm210, %v567, 0
        %v668 = vsel %vm307, %v570, 0
        %670 = vmatprep.subr.mxu0 0.0
        %671 = vmatpush1.msra.mxu0 %v569
        %672 = vmatprep.subr.mxu0 0.0
        %673 = vmatpush1.msra.mxu0 %v668
        %674 = vmatprep.subr.mxu0 0.0
        %675 = vmatpush1.msra.mxu0 0.0
        %676 = vmatprep.subr.mxu0 0.0
        %677 = vmatpush1.msra.mxu0 0.0
        %678 = vmatprep.subr.mxu0 0.0
        %679 = vmatpush1.msra.mxu0 0.0
        %680 = vmatprep.subr.mxu0 0.0
        %681 = vmatpush1.msra.mxu0 0.0
        %682 = vmatprep.subr.mxu0 0.0
        %683 = vmatpush1.msra.mxu0 0.0
        %684 = vmatprep.subr.mxu0 0.0
        %685 = vmatpush1.msra.mxu0 0.0
        %686 = vmatprep.subr.mxu0 0.0
        %687 = vmatpush1.msra.mxu0 0.0
        %688 = vmatprep.subr.mxu0 0.0
        %689 = vmatpush1.msra.mxu0 0.0
        %690 = vmatprep.subr.mxu0 0.0
        %691 = vmatpush1.msra.mxu0 0.0
        %692 = vmatprep.subr.mxu0 0.0
        %693 = vmatpush1.msra.mxu0 0.0
        %694 = vmatprep.subr.mxu0 0.0
        %695 = vmatpush1.msra.mxu0 0.0
        %696 = vmatprep.subr.mxu0 0.0
        %697 = vmatpush1.msra.mxu0 0.0
        %698 = vmatprep.subr.mxu0 0.0
        %699 = vmatpush1.msra.mxu0 0.0
        %700 = vmatprep.subr.mxu0 0.0
        %701 = vmatpush1.msra.mxu0 0.0
        %702 = vmatprep.subr.mxu0 0.0
        %703 = vmatpush1.msra.mxu0 0.0
        %704 = vmatprep.subr.mxu0 0.0
        %705 = vmatpush1.msra.mxu0 0.0
        %706 = vmatprep.subr.mxu0 0.0
        %707 = vmatpush1.msra.mxu0 0.0
        %708 = vmatprep.subr.mxu0 0.0
        %709 = vmatpush1.msra.mxu0 0.0
        %710 = vmatprep.subr.mxu0 0.0
        %711 = vmatpush1.msra.mxu0 0.0
        %712 = vmatprep.subr.mxu0 0.0
        %713 = vmatpush1.msra.mxu0 0.0
        %714 = vmatprep.subr.mxu0 0.0
        %715 = vmatpush1.msra.mxu0 0.0
        %716 = vmatprep.subr.mxu0 0.0
        %717 = vmatpush1.msra.mxu0 0.0
        %718 = vmatprep.subr.mxu0 0.0
        %719 = vmatpush1.msra.mxu0 0.0
        %720 = vmatprep.subr.mxu0 0.0
        %721 = vmatpush1.msra.mxu0 0.0
        %722 = vmatprep.subr.mxu0 0.0
        %723 = vmatpush1.msra.mxu0 0.0
        %724 = vmatprep.subr.mxu0 0.0
        %725 = vmatpush1.msra.mxu0 0.0
        %726 = vmatprep.subr.mxu0 0.0
        %727 = vmatpush1.msra.mxu0 0.0
        %728 = vmatprep.subr.mxu0 0.0
        %729 = vmatpush1.msra.mxu0 0.0
        %730 = vmatprep.subr.mxu0 0.0
        %731 = vmatpush1.msra.mxu0 0.0
        %732 = vmatprep.subr.mxu0 0.0
        %733 = vmatpush1.msra.mxu0 0.0
        %734 = vmatprep.mubr.f32.mxu0 0.0
        %735 = vmatmul.mubr.f32.gmra.mrb[0].mxu0 %v572
        %v736 = vpop.f32.mrb[0].mxu0
        %v737 = vadd.f32 0.0, %v736
        %v738 = vpop.f32.mrb[0].mxu0
        %739 = vmatprep.mubr.f32.mxu0 0.0
        %740 = vmatmul.mubr.f32.gmra.mrb[0].mxu0 %v575
        %v741 = vpop.f32.mrb[0].mxu0
        %v742 = vadd.f32 0.0, %v741
        %v743 = vpop.f32.mrb[0].mxu0
        %744 = vmatprep.mubr.f32.mxu0 0.0
        %745 = vmatmul.mubr.f32.gmra.mrb[0].mxu0 %v578
        %v746 = vpop.f32.mrb[0].mxu0
        %v747 = vadd.f32 0.0, %v746
        %v748 = vpop.f32.mrb[0].mxu0
        %749 = vmatprep.mubr.f32.mxu0 0.0
        %750 = vmatmul.mubr.f32.gmra.mrb[0].mxu0 %v581
        %v751 = vpop.f32.mrb[0].mxu0
        %v752 = vadd.f32 0.0, %v751
        %v753 = vpop.f32.mrb[0].mxu0
        %754 = vmatprep.mubr.f32.mxu0 0.0
        %755 = vmatmul.mubr.f32.gmra.mrb[0].mxu0 %v584
        %v756 = vpop.f32.mrb[0].mxu0
        %v757 = vadd.f32 0.0, %v756
        %v758 = vpop.f32.mrb[0].mxu0
        %759 = vmatprep.mubr.f32.mxu0 0.0
        %760 = vmatmul.mubr.f32.gmra.mrb[0].mxu0 %v587
        %v761 = vpop.f32.mrb[0].mxu0
        %v762 = vadd.f32 0.0, %v761
        %v763 = vpop.f32.mrb[0].mxu0
        %764 = vmatprep.mubr.f32.mxu0 0.0
        %765 = vmatmul.mubr.f32.gmra.mrb[0].mxu0 %v590
        %v766 = vpop.f32.mrb[0].mxu0
        %v767 = vadd.f32 0.0, %v766
        %v768 = vpop.f32.mrb[0].mxu0
        %769 = vmatprep.mubr.f32.mxu0 0.0
        %770 = vmatmul.mubr.f32.gmra.mrb[0].mxu0 %v593
        %v771 = vpop.f32.mrb[0].mxu0
        %v772 = vadd.f32 0.0, %v771
        %v773 = vpop.f32.mrb[0].mxu0
        %774 = vmatprep.mubr.f32.mxu0 0.0
        %775 = vmatmul.mubr.f32.gmra.mrb[0].mxu0 %v596
        %v776 = vpop.f32.mrb[0].mxu0
        %v777 = vadd.f32 0.0, %v776
        %v778 = vpop.f32.mrb[0].mxu0
        %779 = vmatprep.mubr.f32.mxu0 0.0
        %780 = vmatmul.mubr.f32.gmra.mrb[0].mxu0 %v599
        %v781 = vpop.f32.mrb[0].mxu0
        %v782 = vadd.f32 0.0, %v781
        %v783 = vpop.f32.mrb[0].mxu0
        %784 = vmatprep.mubr.f32.mxu0 0.0
        %785 = vmatmul.mubr.f32.gmra.mrb[0].mxu0 %v602
        %v786 = vpop.f32.mrb[0].mxu0
        %v787 = vadd.f32 0.0, %v786
        %v788 = vpop.f32.mrb[0].mxu0
        %789 = vmatprep.mubr.f32.mxu0 0.0
        %790 = vmatmul.mubr.f32.gmra.mrb[0].mxu0 %v605
        %v791 = vpop.f32.mrb[0].mxu0
        %v792 = vadd.f32 0.0, %v791
        %v793 = vpop.f32.mrb[0].mxu0
        %794 = vmatprep.mubr.f32.mxu0 0.0
        %795 = vmatmul.mubr.f32.gmra.mrb[0].mxu0 %v608
        %v796 = vpop.f32.mrb[0].mxu0
        %v797 = vadd.f32 0.0, %v796
        %v798 = vpop.f32.mrb[0].mxu0
        %799 = vmatprep.mubr.f32.mxu0 0.0
        %800 = vmatmul.mubr.f32.gmra.mrb[0].mxu0 %v611
        %v801 = vpop.f32.mrb[0].mxu0
        %v802 = vadd.f32 0.0, %v801
        %v803 = vpop.f32.mrb[0].mxu0
        %804 = vmatprep.mubr.f32.mxu0 0.0
        %805 = vmatmul.mubr.f32.gmra.mrb[0].mxu0 %v614
        %v806 = vpop.f32.mrb[0].mxu0
        %v807 = vadd.f32 0.0, %v806
        %v808 = vpop.f32.mrb[0].mxu0
        %809 = vmatprep.mubr.f32.mxu0 0.0
        %810 = vmatmul.mubr.f32.gmra.mrb[0].mxu0 %v617
        %v811 = vpop.f32.mrb[0].mxu0
        %v812 = vadd.f32 0.0, %v811
        %v813 = vpop.f32.mrb[0].mxu0
        %814 = vmatprep.mubr.f32.mxu0 0.0
        %815 = vmatmul.mubr.f32.gmra.mrb[0].mxu0 %v620
        %v816 = vpop.f32.mrb[0].mxu0
        %v817 = vadd.f32 0.0, %v816
        %v818 = vpop.f32.mrb[0].mxu0
        %819 = vmatprep.mubr.f32.mxu0 0.0
        %820 = vmatmul.mubr.f32.gmra.mrb[0].mxu0 %v623
        %v821 = vpop.f32.mrb[0].mxu0
        %v822 = vadd.f32 0.0, %v821
        %v823 = vpop.f32.mrb[0].mxu0
        %824 = vmatprep.mubr.f32.mxu0 0.0
        %825 = vmatmul.mubr.f32.gmra.mrb[0].mxu0 %v626
        %v826 = vpop.f32.mrb[0].mxu0
        %v827 = vadd.f32 0.0, %v826
        %v828 = vpop.f32.mrb[0].mxu0
        %829 = vmatprep.mubr.f32.mxu0 0.0
        %830 = vmatmul.mubr.f32.gmra.mrb[0].mxu0 %v629
        %v831 = vpop.f32.mrb[0].mxu0
        %v832 = vadd.f32 0.0, %v831
        %v833 = vpop.f32.mrb[0].mxu0
        %834 = vmatprep.mubr.f32.mxu0 0.0
        %835 = vmatmul.mubr.f32.gmra.mrb[0].mxu0 %v632
        %v836 = vpop.f32.mrb[0].mxu0
        %v837 = vadd.f32 0.0, %v836
        %v838 = vpop.f32.mrb[0].mxu0
        %839 = vmatprep.mubr.f32.mxu0 0.0
        %840 = vmatmul.mubr.f32.gmra.mrb[0].mxu0 %v635
        %v841 = vpop.f32.mrb[0].mxu0
        %v842 = vadd.f32 0.0, %v841
        %v843 = vpop.f32.mrb[0].mxu0
        %844 = vmatprep.mubr.f32.mxu0 0.0
        %845 = vmatmul.mubr.f32.gmra.mrb[0].mxu0 %v638
        %v846 = vpop.f32.mrb[0].mxu0
        %v847 = vadd.f32 0.0, %v846
        %v848 = vpop.f32.mrb[0].mxu0
        %849 = vmatprep.mubr.f32.mxu0 0.0
        %850 = vmatmul.mubr.f32.gmra.mrb[0].mxu0 %v641
        %v851 = vpop.f32.mrb[0].mxu0
        %v852 = vadd.f32 0.0, %v851
        %v853 = vpop.f32.mrb[0].mxu0
        %854 = vmatprep.mubr.f32.mxu0 0.0
        %855 = vmatmul.mubr.f32.gmra.mrb[0].mxu0 %v644
        %v856 = vpop.f32.mrb[0].mxu0
        %v857 = vadd.f32 0.0, %v856
        %v858 = vpop.f32.mrb[0].mxu0
        %859 = vmatprep.mubr.f32.mxu0 0.0
        %860 = vmatmul.mubr.f32.gmra.mrb[0].mxu0 %v647
        %v861 = vpop.f32.mrb[0].mxu0
        %v862 = vadd.f32 0.0, %v861
        %v863 = vpop.f32.mrb[0].mxu0
        %864 = vmatprep.mubr.f32.mxu0 0.0
        %865 = vmatmul.mubr.f32.gmra.mrb[0].mxu0 %v650
        %v866 = vpop.f32.mrb[0].mxu0
        %v867 = vadd.f32 0.0, %v866
        %v868 = vpop.f32.mrb[0].mxu0
        %869 = vmatprep.mubr.f32.mxu0 0.0
        %870 = vmatmul.mubr.f32.gmra.mrb[0].mxu0 %v653
        %v871 = vpop.f32.mrb[0].mxu0
        %v872 = vadd.f32 0.0, %v871
        %v873 = vpop.f32.mrb[0].mxu0
        %874 = vmatprep.mubr.f32.mxu0 0.0
        %875 = vmatmul.mubr.f32.gmra.mrb[0].mxu0 %v656
        %v876 = vpop.f32.mrb[0].mxu0
        %v877 = vadd.f32 0.0, %v876
        %v878 = vpop.f32.mrb[0].mxu0
        %879 = vmatprep.mubr.f32.mxu0 0.0
        %880 = vmatmul.mubr.f32.gmra.mrb[0].mxu0 %v659
        %v881 = vpop.f32.mrb[0].mxu0
        %v882 = vadd.f32 0.0, %v881
        %v883 = vpop.f32.mrb[0].mxu0
        %884 = vmatprep.mubr.f32.mxu0 0.0
        %885 = vmatmul.mubr.f32.gmra.mrb[0].mxu0 %v662
        %v886 = vpop.f32.mrb[0].mxu0
        %v887 = vadd.f32 0.0, %v886
        %v888 = vpop.f32.mrb[0].mxu0
        %889 = vmatprep.mubr.f32.mxu0 0.0
        %890 = vmatmul.mubr.f32.gmra.mrb[0].mxu0 %v665
        %v891 = vpop.f32.mrb[0].mxu0
        %v892 = vadd.f32 0.0, %v891
        %v893 = vpop.f32.mrb[0].mxu0
        %894 = vdwg.mxu0
        %v895 = vadd.f32 %v378, %v737
        %v896 = vadd.f32 %v383, %v742
        %v897 = vadd.f32 %v388, %v747
        %v898 = vadd.f32 %v393, %v752
        %v899 = vadd.f32 %v398, %v757
        %v900 = vadd.f32 %v403, %v762
        %v901 = vadd.f32 %v408, %v767
        %v902 = vadd.f32 %v413, %v772
        %v903 = vadd.f32 %v418, %v777
        %v904 = vadd.f32 %v423, %v782
        %v905 = vadd.f32 %v428, %v787
        %v906 = vadd.f32 %v433, %v792
        %v907 = vadd.f32 %v438, %v797
        %v908 = vadd.f32 %v443, %v802
        %v909 = vadd.f32 %v448, %v807
        %v910 = vadd.f32 %v453, %v812
        %v911 = vadd.f32 %v458, %v817
        %v912 = vadd.f32 %v463, %v822
        %v913 = vadd.f32 %v468, %v827
        %v914 = vadd.f32 %v473, %v832
        %v915 = vadd.f32 %v478, %v837
        %v916 = vadd.f32 %v483, %v842
        %v917 = vadd.f32 %v488, %v847
        %v918 = vadd.f32 %v493, %v852
        %v919 = vadd.f32 %v498, %v857
        %v920 = vadd.f32 %v503, %v862
        %v921 = vadd.f32 %v508, %v867
        %v922 = vadd.f32 %v513, %v872
        %v923 = vadd.f32 %v518, %v877
        %v924 = vadd.f32 %v523, %v882
        %v925 = vadd.f32 %v528, %v887
        %v926 = vadd.f32 %v533, %v892
        %v927 = vld [vmem:[%s168 + $0x20] sm:$0xff]
        %v928 = vld [vmem:[%s168 + $0x28] sm:$0xff]
        %v929 = vld [vmem:[%s168 + $0x30] sm:$0xff]
        %v930 = vld [vmem:[%s168 + $0x38] sm:$0xff]
        %v931 = vld [vmem:[%s168 + $0x40] sm:$0xff]
        %v932 = vld [vmem:[%s168 + $0x48] sm:$0xff]
        %v933 = vld [vmem:[%s168 + $0x50] sm:$0xff]
        %v934 = vld [vmem:[%s168 + $0x58] sm:$0xff]
        %v935 = vld [vmem:[%s168 + $0x60] sm:$0xff]
        %v936 = vld [vmem:[%s168 + $0x68] sm:$0xff]
        %v937 = vld [vmem:[%s168 + $0x70] sm:$0xff]
        %v938 = vld [vmem:[%s168 + $0x78] sm:$0xff]
        %v939 = vld [vmem:[%s168 + $0x80] sm:$0xff]
        %v940 = vld [vmem:[%s168 + $0x88] sm:$0xff]
        %v941 = vld [vmem:[%s168 + $0x90] sm:$0xff]
        %v942 = vld [vmem:[%s168 + $0x98] sm:$0xff]
        %v943 = vld [vmem:[%s168 + $0xa0] sm:$0xff]
        %v944 = vld [vmem:[%s168 + $0xa8] sm:$0xff]
        %v945 = vld [vmem:[%s168 + $0xb0] sm:$0xff]
        %v946 = vld [vmem:[%s168 + $0xb8] sm:$0xff]
        %v947 = vld [vmem:[%s168 + $0xc0] sm:$0xff]
        %v948 = vld [vmem:[%s168 + $0xc8] sm:$0xff]
        %v949 = vld [vmem:[%s168 + $0xd0] sm:$0xff]
        %v950 = vld [vmem:[%s168 + $0xd8] sm:$0xff]
        %v951 = vld [vmem:[%s168 + $0xe0] sm:$0xff]
        %v952 = vld [vmem:[%s168 + $0xe8] sm:$0xff]
        %v953 = vld [vmem:[%s168 + $0xf0] sm:$0xff]
        %v954 = vld [vmem:[%s168 + $0xf8] sm:$0xff]
        %v955 = vld [vmem:[%s168 + $0x100] sm:$0xff]
        %v956 = vld [vmem:[%s168 + $0x108] sm:$0xff]
        %v957 = vld [vmem:[%s168 + $0x110] sm:$0xff]
        %v958 = vld [vmem:[%s168 + $0x118] sm:$0xff]
        %s959 = scalar_lea.vmem %s1, 32
        %v960 = vld [vmem:[%s959] sm:$0xff]
        %v961 = vld [vmem:[%s959 + $0x8] sm:$0xf]
        %v963 = vsel %vm210, %v927, 0
        %v966 = vsel %vm210, %v928, 0
        %v969 = vsel %vm210, %v929, 0
        %v972 = vsel %vm210, %v930, 0
        %v975 = vsel %vm210, %v931, 0
        %v978 = vsel %vm210, %v932, 0
        %v981 = vsel %vm210, %v933, 0
        %v984 = vsel %vm210, %v934, 0
        %v987 = vsel %vm210, %v935, 0
        %v990 = vsel %vm210, %v936, 0
        %v993 = vsel %vm210, %v937, 0
        %v996 = vsel %vm210, %v938, 0
        %v999 = vsel %vm210, %v939, 0
        %v1002 = vsel %vm210, %v940, 0
        %v1005 = vsel %vm210, %v941, 0
        %v1008 = vsel %vm210, %v942, 0
        %v1011 = vsel %vm210, %v943, 0
        %v1014 = vsel %vm210, %v944, 0
        %v1017 = vsel %vm210, %v945, 0
        %v1020 = vsel %vm210, %v946, 0
        %v1023 = vsel %vm210, %v947, 0
        %v1026 = vsel %vm210, %v948, 0
        %v1029 = vsel %vm210, %v949, 0
        %v1032 = vsel %vm210, %v950, 0
        %v1035 = vsel %vm210, %v951, 0
        %v1038 = vsel %vm210, %v952, 0
        %v1041 = vsel %vm210, %v953, 0
        %v1044 = vsel %vm210, %v954, 0
        %v1047 = vsel %vm210, %v955, 0
        %v1050 = vsel %vm210, %v956, 0
        %v1053 = vsel %vm210, %v957, 0
        %v1056 = vsel %vm210, %v958, 0
        %v1059 = vsel %vm307, %v961, 0
        %1061 = vmatprep.subr.mxu0 0.0
        %1062 = vmatpush1.msra.mxu0 %v960
        %1063 = vmatprep.subr.mxu0 0.0
        %1064 = vmatpush1.msra.mxu0 %v1059
        %1065 = vmatprep.subr.mxu0 0.0
        %1066 = vmatpush1.msra.mxu0 0.0
        %1067 = vmatprep.subr.mxu0 0.0
        %1068 = vmatpush1.msra.mxu0 0.0
        %1069 = vmatprep.subr.mxu0 0.0
        %1070 = vmatpush1.msra.mxu0 0.0
        %1071 = vmatprep.subr.mxu0 0.0
        %1072 = vmatpush1.msra.mxu0 0.0
        %1073 = vmatprep.subr.mxu0 0.0
        %1074 = vmatpush1.msra.mxu0 0.0
        %1075 = vmatprep.subr.mxu0 0.0
        %1076 = vmatpush1.msra.mxu0 0.0
        %1077 = vmatprep.subr.mxu0 0.0
        %1078 = vmatpush1.msra.mxu0 0.0
        %1079 = vmatprep.subr.mxu0 0.0
        %1080 = vmatpush1.msra.mxu0 0.0
        %1081 = vmatprep.subr.mxu0 0.0
        %1082 = vmatpush1.msra.mxu0 0.0
        %1083 = vmatprep.subr.mxu0 0.0
        %1084 = vmatpush1.msra.mxu0 0.0
        %1085 = vmatprep.subr.mxu0 0.0
        %1086 = vmatpush1.msra.mxu0 0.0
        %1087 = vmatprep.subr.mxu0 0.0
        %1088 = vmatpush1.msra.mxu0 0.0
        %1089 = vmatprep.subr.mxu0 0.0
        %1090 = vmatpush1.msra.mxu0 0.0
        %1091 = vmatprep.subr.mxu0 0.0
        %1092 = vmatpush1.msra.mxu0 0.0
        %1093 = vmatprep.subr.mxu0 0.0
        %1094 = vmatpush1.msra.mxu0 0.0
        %1095 = vmatprep.subr.mxu0 0.0
        %1096 = vmatpush1.msra.mxu0 0.0
        %1097 = vmatprep.subr.mxu0 0.0
        %1098 = vmatpush1.msra.mxu0 0.0
        %1099 = vmatprep.subr.mxu0 0.0
        %1100 = vmatpush1.msra.mxu0 0.0
        %1101 = vmatprep.subr.mxu0 0.0
        %1102 = vmatpush1.msra.mxu0 0.0
        %1103 = vmatprep.subr.mxu0 0.0
        %1104 = vmatpush1.msra.mxu0 0.0
        %1105 = vmatprep.subr.mxu0 0.0
        %1106 = vmatpush1.msra.mxu0 0.0
        %1107 = vmatprep.subr.mxu0 0.0
        %1108 = vmatpush1.msra.mxu0 0.0
        %1109 = vmatprep.subr.mxu0 0.0
        %1110 = vmatpush1.msra.mxu0 0.0
        %1111 = vmatprep.subr.mxu0 0.0
        %1112 = vmatpush1.msra.mxu0 0.0
        %1113 = vmatprep.subr.mxu0 0.0
        %1114 = vmatpush1.msra.mxu0 0.0
        %1115 = vmatprep.subr.mxu0 0.0
        %1116 = vmatpush1.msra.mxu0 0.0
        %1117 = vmatprep.subr.mxu0 0.0
        %1118 = vmatpush1.msra.mxu0 0.0
        %1119 = vmatprep.subr.mxu0 0.0
        %1120 = vmatpush1.msra.mxu0 0.0
        %1121 = vmatprep.subr.mxu0 0.0
        %1122 = vmatpush1.msra.mxu0 0.0
        %1123 = vmatprep.subr.mxu0 0.0
        %1124 = vmatpush1.msra.mxu0 0.0
        %1125 = vmatprep.mubr.f32.mxu0 0.0
        %1126 = vmatmul.mubr.f32.gmra.mrb[0].mxu0 %v963
        %v1127 = vpop.f32.mrb[0].mxu0
        %v1128 = vadd.f32 0.0, %v1127
        %v1129 = vpop.f32.mrb[0].mxu0
        %1130 = vmatprep.mubr.f32.mxu0 0.0
        %1131 = vmatmul.mubr.f32.gmra.mrb[0].mxu0 %v966
        %v1132 = vpop.f32.mrb[0].mxu0
        %v1133 = vadd.f32 0.0, %v1132
        %v1134 = vpop.f32.mrb[0].mxu0
        %1135 = vmatprep.mubr.f32.mxu0 0.0
        %1136 = vmatmul.mubr.f32.gmra.mrb[0].mxu0 %v969
        %v1137 = vpop.f32.mrb[0].mxu0
        %v1138 = vadd.f32 0.0, %v1137
        %v1139 = vpop.f32.mrb[0].mxu0
        %1140 = vmatprep.mubr.f32.mxu0 0.0
        %1141 = vmatmul.mubr.f32.gmra.mrb[0].mxu0 %v972
        %v1142 = vpop.f32.mrb[0].mxu0
        %v1143 = vadd.f32 0.0, %v1142
        %v1144 = vpop.f32.mrb[0].mxu0
        %1145 = vmatprep.mubr.f32.mxu0 0.0
        %1146 = vmatmul.mubr.f32.gmra.mrb[0].mxu0 %v975
        %v1147 = vpop.f32.mrb[0].mxu0
        %v1148 = vadd.f32 0.0, %v1147
        %v1149 = vpop.f32.mrb[0].mxu0
        %1150 = vmatprep.mubr.f32.mxu0 0.0
        %1151 = vmatmul.mubr.f32.gmra.mrb[0].mxu0 %v978
        %v1152 = vpop.f32.mrb[0].mxu0
        %v1153 = vadd.f32 0.0, %v1152
        %v1154 = vpop.f32.mrb[0].mxu0
        %1155 = vmatprep.mubr.f32.mxu0 0.0
        %1156 = vmatmul.mubr.f32.gmra.mrb[0].mxu0 %v981
        %v1157 = vpop.f32.mrb[0].mxu0
        %v1158 = vadd.f32 0.0, %v1157
        %v1159 = vpop.f32.mrb[0].mxu0
        %1160 = vmatprep.mubr.f32.mxu0 0.0
        %1161 = vmatmul.mubr.f32.gmra.mrb[0].mxu0 %v984
        %v1162 = vpop.f32.mrb[0].mxu0
        %v1163 = vadd.f32 0.0, %v1162
        %v1164 = vpop.f32.mrb[0].mxu0
        %1165 = vmatprep.mubr.f32.mxu0 0.0
        %1166 = vmatmul.mubr.f32.gmra.mrb[0].mxu0 %v987
        %v1167 = vpop.f32.mrb[0].mxu0
        %v1168 = vadd.f32 0.0, %v1167
        %v1169 = vpop.f32.mrb[0].mxu0
        %1170 = vmatprep.mubr.f32.mxu0 0.0
        %1171 = vmatmul.mubr.f32.gmra.mrb[0].mxu0 %v990
        %v1172 = vpop.f32.mrb[0].mxu0
        %v1173 = vadd.f32 0.0, %v1172
        %v1174 = vpop.f32.mrb[0].mxu0
        %1175 = vmatprep.mubr.f32.mxu0 0.0
        %1176 = vmatmul.mubr.f32.gmra.mrb[0].mxu0 %v993
        %v1177 = vpop.f32.mrb[0].mxu0
        %v1178 = vadd.f32 0.0, %v1177
        %v1179 = vpop.f32.mrb[0].mxu0
        %1180 = vmatprep.mubr.f32.mxu0 0.0
        %1181 = vmatmul.mubr.f32.gmra.mrb[0].mxu0 %v996
        %v1182 = vpop.f32.mrb[0].mxu0
        %v1183 = vadd.f32 0.0, %v1182
        %v1184 = vpop.f32.mrb[0].mxu0
        %1185 = vmatprep.mubr.f32.mxu0 0.0
        %1186 = vmatmul.mubr.f32.gmra.mrb[0].mxu0 %v999
        %v1187 = vpop.f32.mrb[0].mxu0
        %v1188 = vadd.f32 0.0, %v1187
        %v1189 = vpop.f32.mrb[0].mxu0
        %1190 = vmatprep.mubr.f32.mxu0 0.0
        %1191 = vmatmul.mubr.f32.gmra.mrb[0].mxu0 %v1002
        %v1192 = vpop.f32.mrb[0].mxu0
        %v1193 = vadd.f32 0.0, %v1192
        %v1194 = vpop.f32.mrb[0].mxu0
        %1195 = vmatprep.mubr.f32.mxu0 0.0
        %1196 = vmatmul.mubr.f32.gmra.mrb[0].mxu0 %v1005
        %v1197 = vpop.f32.mrb[0].mxu0
        %v1198 = vadd.f32 0.0, %v1197
        %v1199 = vpop.f32.mrb[0].mxu0
        %1200 = vmatprep.mubr.f32.mxu0 0.0
        %1201 = vmatmul.mubr.f32.gmra.mrb[0].mxu0 %v1008
        %v1202 = vpop.f32.mrb[0].mxu0
        %v1203 = vadd.f32 0.0, %v1202
        %v1204 = vpop.f32.mrb[0].mxu0
        %1205 = vmatprep.mubr.f32.mxu0 0.0
        %1206 = vmatmul.mubr.f32.gmra.mrb[0].mxu0 %v1011
        %v1207 = vpop.f32.mrb[0].mxu0
        %v1208 = vadd.f32 0.0, %v1207
        %v1209 = vpop.f32.mrb[0].mxu0
        %1210 = vmatprep.mubr.f32.mxu0 0.0
        %1211 = vmatmul.mubr.f32.gmra.mrb[0].mxu0 %v1014
        %v1212 = vpop.f32.mrb[0].mxu0
        %v1213 = vadd.f32 0.0, %v1212
        %v1214 = vpop.f32.mrb[0].mxu0
        %1215 = vmatprep.mubr.f32.mxu0 0.0
        %1216 = vmatmul.mubr.f32.gmra.mrb[0].mxu0 %v1017
        %v1217 = vpop.f32.mrb[0].mxu0
        %v1218 = vadd.f32 0.0, %v1217
        %v1219 = vpop.f32.mrb[0].mxu0
        %1220 = vmatprep.mubr.f32.mxu0 0.0
        %1221 = vmatmul.mubr.f32.gmra.mrb[0].mxu0 %v1020
        %v1222 = vpop.f32.mrb[0].mxu0
        %v1223 = vadd.f32 0.0, %v1222
        %v1224 = vpop.f32.mrb[0].mxu0
        %1225 = vmatprep.mubr.f32.mxu0 0.0
        %1226 = vmatmul.mubr.f32.gmra.mrb[0].mxu0 %v1023
        %v1227 = vpop.f32.mrb[0].mxu0
        %v1228 = vadd.f32 0.0, %v1227
        %v1229 = vpop.f32.mrb[0].mxu0
        %1230 = vmatprep.mubr.f32.mxu0 0.0
        %1231 = vmatmul.mubr.f32.gmra.mrb[0].mxu0 %v1026
        %v1232 = vpop.f32.mrb[0].mxu0
        %v1233 = vadd.f32 0.0, %v1232
        %v1234 = vpop.f32.mrb[0].mxu0
        %1235 = vmatprep.mubr.f32.mxu0 0.0
        %1236 = vmatmul.mubr.f32.gmra.mrb[0].mxu0 %v1029
        %v1237 = vpop.f32.mrb[0].mxu0
        %v1238 = vadd.f32 0.0, %v1237
        %v1239 = vpop.f32.mrb[0].mxu0
        %1240 = vmatprep.mubr.f32.mxu0 0.0
        %1241 = vmatmul.mubr.f32.gmra.mrb[0].mxu0 %v1032
        %v1242 = vpop.f32.mrb[0].mxu0
        %v1243 = vadd.f32 0.0, %v1242
        %v1244 = vpop.f32.mrb[0].mxu0
        %1245 = vmatprep.mubr.f32.mxu0 0.0
        %1246 = vmatmul.mubr.f32.gmra.mrb[0].mxu0 %v1035
        %v1247 = vpop.f32.mrb[0].mxu0
        %v1248 = vadd.f32 0.0, %v1247
        %v1249 = vpop.f32.mrb[0].mxu0
        %1250 = vmatprep.mubr.f32.mxu0 0.0
        %1251 = vmatmul.mubr.f32.gmra.mrb[0].mxu0 %v1038
        %v1252 = vpop.f32.mrb[0].mxu0
        %v1253 = vadd.f32 0.0, %v1252
        %v1254 = vpop.f32.mrb[0].mxu0
        %1255 = vmatprep.mubr.f32.mxu0 0.0
        %1256 = vmatmul.mubr.f32.gmra.mrb[0].mxu0 %v1041
        %v1257 = vpop.f32.mrb[0].mxu0
        %v1258 = vadd.f32 0.0, %v1257
        %v1259 = vpop.f32.mrb[0].mxu0
        %1260 = vmatprep.mubr.f32.mxu0 0.0
        %1261 = vmatmul.mubr.f32.gmra.mrb[0].mxu0 %v1044
        %v1262 = vpop.f32.mrb[0].mxu0
        %v1263 = vadd.f32 0.0, %v1262
        %v1264 = vpop.f32.mrb[0].mxu0
        %1265 = vmatprep.mubr.f32.mxu0 0.0
        %1266 = vmatmul.mubr.f32.gmra.mrb[0].mxu0 %v1047
        %v1267 = vpop.f32.mrb[0].mxu0
        %v1268 = vadd.f32 0.0, %v1267
        %v1269 = vpop.f32.mrb[0].mxu0
        %1270 = vmatprep.mubr.f32.mxu0 0.0
        %1271 = vmatmul.mubr.f32.gmra.mrb[0].mxu0 %v1050
        %v1272 = vpop.f32.mrb[0].mxu0
        %v1273 = vadd.f32 0.0, %v1272
        %v1274 = vpop.f32.mrb[0].mxu0
        %1275 = vmatprep.mubr.f32.mxu0 0.0
        %1276 = vmatmul.mubr.f32.gmra.mrb[0].mxu0 %v1053
        %v1277 = vpop.f32.mrb[0].mxu0
        %v1278 = vadd.f32 0.0, %v1277
        %v1279 = vpop.f32.mrb[0].mxu0
        %1280 = vmatprep.mubr.f32.mxu0 0.0
        %1281 = vmatmul.mubr.f32.gmra.mrb[0].mxu0 %v1056
        %v1282 = vpop.f32.mrb[0].mxu0
        %v1283 = vadd.f32 0.0, %v1282
        %v1284 = vpop.f32.mrb[0].mxu0
        %1285 = vdwg.mxu0
        %v1286 = vadd.f32 %v895, %v1128
        %v1287 = vadd.f32 %v896, %v1133
        %v1288 = vadd.f32 %v897, %v1138
        %v1289 = vadd.f32 %v898, %v1143
        %v1290 = vadd.f32 %v899, %v1148
        %v1291 = vadd.f32 %v900, %v1153
        %v1292 = vadd.f32 %v901, %v1158
        %v1293 = vadd.f32 %v902, %v1163
        %v1294 = vadd.f32 %v903, %v1168
        %v1295 = vadd.f32 %v904, %v1173
        %v1296 = vadd.f32 %v905, %v1178
        %v1297 = vadd.f32 %v906, %v1183
        %v1298 = vadd.f32 %v907, %v1188
        %v1299 = vadd.f32 %v908, %v1193
        %v1300 = vadd.f32 %v909, %v1198
        %v1301 = vadd.f32 %v910, %v1203
        %v1302 = vadd.f32 %v911, %v1208
        %v1303 = vadd.f32 %v912, %v1213
        %v1304 = vadd.f32 %v913, %v1218
        %v1305 = vadd.f32 %v914, %v1223
        %v1306 = vadd.f32 %v915, %v1228
        %v1307 = vadd.f32 %v916, %v1233
        %v1308 = vadd.f32 %v917, %v1238
        %v1309 = vadd.f32 %v918, %v1243
        %v1310 = vadd.f32 %v919, %v1248
        %v1311 = vadd.f32 %v920, %v1253
        %v1312 = vadd.f32 %v921, %v1258
        %v1313 = vadd.f32 %v922, %v1263
        %v1314 = vadd.f32 %v923, %v1268
        %v1315 = vadd.f32 %v924, %v1273
        %v1316 = vadd.f32 %v925, %v1278
        %v1317 = vadd.f32 %v926, %v1283
        %1318 = vst [vmem:[%s163] sm:$0xff] %v1286
        %1319 = vst [vmem:[%s163 + $0x8] sm:$0xff] %v1287
        %1320 = vst [vmem:[%s163 + $0x10] sm:$0xff] %v1288
        %1321 = vst [vmem:[%s163 + $0x18] sm:$0xff] %v1289
        %1322 = vst [vmem:[%s163 + $0x20] sm:$0xff] %v1290
        %1323 = vst [vmem:[%s163 + $0x28] sm:$0xff] %v1291
        %1324 = vst [vmem:[%s163 + $0x30] sm:$0xff] %v1292
        %1325 = vst [vmem:[%s163 + $0x38] sm:$0xff] %v1293
        %1326 = vst [vmem:[%s163 + $0x40] sm:$0xff] %v1294
        %1327 = vst [vmem:[%s163 + $0x48] sm:$0xff] %v1295
        %1328 = vst [vmem:[%s163 + $0x50] sm:$0xff] %v1296
        %1329 = vst [vmem:[%s163 + $0x58] sm:$0xff] %v1297
        %1330 = vst [vmem:[%s163 + $0x60] sm:$0xff] %v1298
        %1331 = vst [vmem:[%s163 + $0x68] sm:$0xff] %v1299
        %1332 = vst [vmem:[%s163 + $0x70] sm:$0xff] %v1300
        %1333 = vst [vmem:[%s163 + $0x78] sm:$0xff] %v1301
        %1334 = vst [vmem:[%s163 + $0x80] sm:$0xff] %v1302
        %1335 = vst [vmem:[%s163 + $0x88] sm:$0xff] %v1303
        %1336 = vst [vmem:[%s163 + $0x90] sm:$0xff] %v1304
        %1337 = vst [vmem:[%s163 + $0x98] sm:$0xff] %v1305
        %1338 = vst [vmem:[%s163 + $0xa0] sm:$0xff] %v1306
        %1339 = vst [vmem:[%s163 + $0xa8] sm:$0xff] %v1307
        %1340 = vst [vmem:[%s163 + $0xb0] sm:$0xff] %v1308
        %1341 = vst [vmem:[%s163 + $0xb8] sm:$0xff] %v1309
        %1342 = vst [vmem:[%s163 + $0xc0] sm:$0xff] %v1310
        %1343 = vst [vmem:[%s163 + $0xc8] sm:$0xff] %v1311
        %1344 = vst [vmem:[%s163 + $0xd0] sm:$0xff] %v1312
        %1345 = vst [vmem:[%s163 + $0xd8] sm:$0xff] %v1313
        %1346 = vst [vmem:[%s163 + $0xe0] sm:$0xff] %v1314
        %1347 = vst [vmem:[%s163 + $0xe8] sm:$0xff] %v1315
        %1348 = vst [vmem:[%s163 + $0xf0] sm:$0xff] %v1316
        %1349 = vst [vmem:[%s163 + $0xf8] sm:$0xff] %v1317
        %s1350 = sand.u32 %s93, 1
        %s1351 = scalar_lea.sflag [#allocation3], %s1350
        %s1352 = sand.u32 %s93, 1
        %s1353 = smul.addr %s1352, 256
        %s1354 = scalar_lea.vmem [#allocation2], %s1353
        // Predicated region
        $region33: #{tpu_custom_call.1} parent=31 // pred_check
          %p1355 = pneg %p103
        $region34: #{tpu_custom_call.1} parent=31 // pred_check_branch
          %1357 = sbr.rel (%p1355) target = $region36
        $region35: #{tpu_custom_call.1} parent=31 // pred_region
          %s1359 = ssub.s32 4096, 4096
          %1360 = vsyncadd %s1351, %s1359
          %s1361 = smul.addr %s17, 32
          %s1362 = smul.addr %s1361, 128
          %s1363 = scalar_lea.hbm %s3, %s1362
          %s1364 = sshll.u32 %s1354, 4
          %s1365 = int_to_ptr.vmem [resolvable:$true] %s1364
          %1370 = dma.vmem_to_hbm [thread:$0]  %s1365, 4096, %s1363, %s1351, 128, 128, 8
        $region36: #{tpu_custom_call.1} parent=31 // pred_fallthru
          _
      $region32: #{tpu_custom_call.1} parent=5 // pred_fallthru
        _
      %p1371 = scmp.le.s32.totalorder 2, %s12
      // Predicated region
      $region37: #{tpu_custom_call.1} parent=5 // pred_check
        %p1372 = pneg %p1371
      $region38: #{tpu_custom_call.1} parent=5 // pred_check_branch
        %1374 = sbr.rel (%p1372) target = $region40
      $region39: #{tpu_custom_call.1} parent=5 // pred_region
        %s1375 = ssub.s32 %s12, 2
        // Predicated region
        $region41: #{tpu_custom_call.1} parent=39 // pred_check
          %p1376 = pneg %p109
        $region42: #{tpu_custom_call.1} parent=39 // pred_check_branch
          %1378 = sbr.rel (%p1376) target = $region44
        $region43: #{tpu_custom_call.1} parent=39 // pred_region
          %s1379 = sand.u32 %s94, 1
          %s1380 = scalar_lea.sflag [#allocation3], %s1379
          %s1381 = sand.u32 %s94, 1
          %s1382 = smul.addr %s1381, 256
          %s1383 = scalar_lea.vmem [#allocation2], %s1382
          %1384 = dma.done %s1380, 4096
        $region44: #{tpu_custom_call.1} parent=39 // pred_fallthru
          _
      $region40: #{tpu_custom_call.1} parent=5 // pred_fallthru
        _
    $region6: #{tpu_custom_call.1} parent=1 // loop_footer
      %s16 = sadd.s32 1, %s12
    $region7: #{tpu_custom_call.1} parent=1 // loop_footer_branch
      %11 = sbr.rel target = $region3
    $region8: #{tpu_custom_call.1} parent=1 // loop_exit
      _
    %1385 = vsyncpa [#allocation3], 1
    %s1386 = scalar_lea.sflag [#allocation3], 1
    %1387 = vsyncpa %s1386, 1

</llo_original>
